<compile_context>
chip_gen: v5e
topology: v5e:2x2
jax: 0.10.0
libtpu: 0.0.40
codegen_flags: <defaults>
</compile_context>

<pallas_src>
import jax
import jax.numpy as jnp
from jax.experimental import pallas as pl
from jax.experimental.pallas import tpu as pltpu


def region_embedding_kernel(text_ref, onehot_ref, w_text_ref, w_typeb_ref, out_ref):
    # Two accumulating MXU passes, f32 accumulation, single store.
    # Bias is pre-folded into w_typeb (one-hot-mean rows sum to 1).
    acc = jnp.dot(text_ref[...], w_text_ref[...],
                  preferred_element_type=jnp.float32)
    acc = acc + jnp.dot(onehot_ref[...], w_typeb_ref[...],
                        preferred_element_type=jnp.float32)
    out_ref[...] = acc.astype(out_ref.dtype)


def _round_up(x, m):
    return ((x + m - 1) // m) * m


def region_embedding_forward(text_emb, type_idx, type_table, weight, bias, *,
                             tile_n=1024, use_bf16=False,
                             out_dtype=jnp.float32):
    """Forward pass of RegionEmbedding (minus the transformer encoder).

    text_emb:   (N, H_text)  f32   synthetic [CLS] embeddings
    type_idx:   (N, T)       i32   region-type indices per region
    type_table: (num_types, H_type) f32  nn.Embedding weight
    weight:     (out, H_text + H_type)  f32  nn.Linear weight
    bias:       (out,)       f32   nn.Linear bias
    """
    N, H_text = text_emb.shape
    num_types, H_type = type_table.shape
    out_size = weight.shape[0]

    # --- wrapper glue (plain JAX, all small tensors) --------------------------
    # Embedding-lookup + mean(dim=1) expressed as a (N, num_types) mean-one-hot.
    onehot_mean = jax.nn.one_hot(type_idx, num_types,
                                 dtype=jnp.float32).mean(axis=1)      # (N, num_types)
    w_text = weight[:, :H_text].T                                     # (H_text, out)
    w_type = weight[:, H_text:].T                                     # (H_type, out)
    # Fold the embedding table AND the bias into the type-side weight.
    # Valid because every one-hot-mean row sums to exactly 1.
    w_typeb = type_table @ w_type + bias[None, :]                     # (num_types, out)

    # Lane-dense output: pad OUT to a multiple of 128 (zero weight columns only;
    # the big streamed activation is never copied).
    out_pad = pl.cdiv(out_size, 128) * 128
    if out_pad != out_size:
        w_text = jnp.pad(w_text, ((0, 0), (0, out_pad - out_size)))
        w_typeb = jnp.pad(w_typeb, ((0, 0), (0, out_pad - out_size)))

    # Optional bf16 streaming operands (realistic model sizes); casts are on the
    # producers (no separate (N, K) cast pass of a concatenated activation).
    if use_bf16:
        text_emb = text_emb.astype(jnp.bfloat16)
        onehot_mean = onehot_mean.astype(jnp.bfloat16)
        w_text = w_text.astype(jnp.bfloat16)
        w_typeb = w_typeb.astype(jnp.bfloat16)
    act_bytes = 2 if use_bf16 else 4
    out_bytes = jnp.dtype(out_dtype).itemsize

    # --- N-tile selection ------------------------------------------------------
    sublane = 16 if use_bf16 else 8
    tn = _round_up(max(1, min(int(tile_n), N)), sublane)
    # Keep >= 2 grid steps when N allows it so v7x's 2 TensorCores both work
    # (dimension_semantics=("parallel",) shards the N axis across them).
    if N > 2 * sublane:
        tn = min(tn, _round_up(pl.cdiv(N, 2), sublane))
    # Conservative VMEM budget (v7x: 32 MiB scoped / 64 MiB physical).
    K_total = H_text + num_types

    def vmem_footprint(t):
        return (2 * t * K_total * act_bytes            # double-buffered activations
                + 2 * t * out_pad * out_bytes          # double-buffered output
                + K_total * out_pad * act_bytes)       # resident weights

    budget = 24 << 20
    while tn > sublane and vmem_footprint(tn) > budget:
        tn = _round_up(max(sublane, tn // 2), sublane)

    grid = (pl.cdiv(N, tn),)

    cost = pl.CostEstimate(
        flops=2 * N * K_total * out_pad,
        transcendentals=0,
        bytes_accessed=(N * K_total * act_bytes
                        + K_total * out_pad * act_bytes
                        + N * out_pad * out_bytes),
    )

    out = pl.pallas_call(
        region_embedding_kernel,
        out_shape=jax.ShapeDtypeStruct((N, out_pad), out_dtype),
        grid=grid,
        in_specs=[
            # Streamed activations, tiled over N (ragged last block handled by
            # Pallas; garbage rows are masked on writeback and sliced off).
            pl.BlockSpec((tn, H_text), lambda i: (i, 0)),
            pl.BlockSpec((tn, num_types), lambda i: (i, 0)),
            # Weights stay VMEM-resident across the whole grid.
            pl.BlockSpec((H_text, out_pad), lambda i: (0, 0)),
            pl.BlockSpec((num_types, out_pad), lambda i: (0, 0)),
        ],
        out_specs=pl.BlockSpec((tn, out_pad), lambda i: (i, 0)),
        compiler_params=pltpu.CompilerParams(
            dimension_semantics=("parallel",)),
        cost_estimate=cost,
    )(text_emb, onehot_mean, w_text, w_typeb)

    # Strip output-dim padding only (N axis was never padded).
    return out[:, :out_size] if out_pad != out_size else out


def reference_forward(text_emb, type_idx, type_table, weight, bias):
    region_types = type_table[type_idx].mean(axis=1)
    cat = jnp.concatenate([text_emb, region_types], axis=-1)
    return cat @ weight.T + bias


if __name__ == "__main__":
    # Small synthetic configuration consistent with the module.
    N = 24                # number of regions (exercises a 2-step grid + ragged tile)
    H_text = 32           # transformer hidden size (text_embedding_size)
    H_type = 16           # region_type_embedding_size
    NUM_REGION_TYPES = 8  # len(RegionType)
    T = 2                 # region types per region (fixed for the IntTensor)
    OUT = 32              # output_size (REGION_EMBEDDING_OUTPUT_SIZE)

    key = jax.random.PRNGKey(0)
    k_txt, k_tab, k_w, k_b, k_idx = jax.random.split(key, 5)

    # Synthetic transformer [CLS] embeddings (stand-in for AutoModel output).
    text_emb = jax.random.normal(k_txt, (N, H_text), dtype=jnp.float32)
    # nn.Embedding weight: N(0, 1) init.
    type_table = jax.random.normal(k_tab, (NUM_REGION_TYPES, H_type),
                                   dtype=jnp.float32)
    # nn.Linear init: U(-1/sqrt(fan_in), 1/sqrt(fan_in)).
    fan_in = H_text + H_type
    bound = 1.0 / jnp.sqrt(jnp.float32(fan_in))
    weight = jax.random.uniform(k_w, (OUT, fan_in), dtype=jnp.float32,
                                minval=-bound, maxval=bound)
    bias = jax.random.uniform(k_b, (OUT,), dtype=jnp.float32,
                              minval=-bound, maxval=bound)
    # Region-type indices per region.
    type_idx = jax.random.randint(k_idx, (N, T), 0, NUM_REGION_TYPES,
                                  dtype=jnp.int32)

    out = region_embedding_forward(text_emb, type_idx, type_table, weight, bias)
    out = jax.block_until_ready(out)

    ref = reference_forward(text_emb, type_idx, type_table, weight, bias)
    assert out.shape == (N, OUT), out.shape
    assert jnp.allclose(out, ref, atol=1e-4, rtol=1e-4), \
        float(jnp.max(jnp.abs(out - ref)))

    print("KERNEL_OK")
</pallas_src>

<mosaic_0001>
module attributes {stable_mosaic.version = 11 : i64} {
  func.func @region_embedding_kernel(%arg0: i32, %arg1: memref<16x32xf32, #tpu.memory_space<vmem>>, %arg2: memref<16x8xf32, #tpu.memory_space<vmem>>, %arg3: memref<32x128xf32, #tpu.memory_space<vmem>>, %arg4: memref<8x128xf32, #tpu.memory_space<vmem>>, %arg5: memref<16x128xf32, #tpu.memory_space<vmem>>) attributes {dimension_semantics = [#tpu.dimension_semantics<parallel>], iteration_bounds = array<i64: 2>, scalar_prefetch = 0 : i64, scratch_operands = 0 : i64, tpu.core_type = #tpu.core_type<tc>, window_params = [{transform_indices = @transform_0, window_bounds = array<i64: 16, 32>}, {transform_indices = @transform_1, window_bounds = array<i64: 16, 8>}, {pipeline_mode = #tpu.pipeline_mode<synchronous>, transform_indices = @transform_2, window_bounds = array<i64: 32, 128>}, {pipeline_mode = #tpu.pipeline_mode<synchronous>, transform_indices = @transform_3, window_bounds = array<i64: 8, 128>}, {transform_indices = @transform_4, window_bounds = array<i64: 16, 128>}]} {
    %c0 = arith.constant 0 : index
    %c0_0 = arith.constant 0 : index
    %0 = vector.load %arg1[%c0, %c0_0] : memref<16x32xf32, #tpu.memory_space<vmem>>, vector<16x32xf32>
    %c0_1 = arith.constant 0 : index
    %c0_2 = arith.constant 0 : index
    %1 = vector.load %arg3[%c0_1, %c0_2] : memref<32x128xf32, #tpu.memory_space<vmem>>, vector<32x128xf32>
    %cst = arith.constant dense<0.000000e+00> : vector<16x128xf32>
    %2 = tpu.matmul %0, %1, %cst {dimension_numbers = #tpu.dot_dimension_numbers<[1], [0], [0], [1], [0, 0, 1, 1], [], []>} : vector<16x32xf32>, vector<32x128xf32>, vector<16x128xf32> -> vector<16x128xf32>
    %c0_3 = arith.constant 0 : index
    %c0_4 = arith.constant 0 : index
    %3 = vector.load %arg2[%c0_3, %c0_4] : memref<16x8xf32, #tpu.memory_space<vmem>>, vector<16x8xf32>
    %c0_5 = arith.constant 0 : index
    %c0_6 = arith.constant 0 : index
    %4 = vector.load %arg4[%c0_5, %c0_6] : memref<8x128xf32, #tpu.memory_space<vmem>>, vector<8x128xf32>
    %cst_7 = arith.constant dense<0.000000e+00> : vector<16x128xf32>
    %5 = tpu.matmul %3, %4, %cst_7 {dimension_numbers = #tpu.dot_dimension_numbers<[1], [0], [0], [1], [0, 0, 1, 1], [], []>} : vector<16x8xf32>, vector<8x128xf32>, vector<16x128xf32> -> vector<16x128xf32>
    %6 = arith.addf %2, %5 : vector<16x128xf32>
    %c0_8 = arith.constant 0 : index
    %c0_9 = arith.constant 0 : index
    %7 = vector.load %arg5[%c0_8, %c0_9] : memref<16x128xf32, #tpu.memory_space<vmem>>, vector<16x128xf32>
    tpu.vector_store %arg5[%c0_8, %c0_9], %6 {strides = array<i32>} : memref<16x128xf32, #tpu.memory_space<vmem>>, vector<16x128xf32>,
    return
  }
  func.func @transform_0(%arg0: i32) -> (i32, i32) {
    %c0_i32 = arith.constant 0 : i32
    %c0_i32_0 = arith.constant 0 : i32
    return %arg0, %c0_i32 : i32, i32
  }
  func.func @transform_1(%arg0: i32) -> (i32, i32) {
    %c0_i32 = arith.constant 0 : i32
    %c0_i32_0 = arith.constant 0 : i32
    return %arg0, %c0_i32 : i32, i32
  }
  func.func @transform_2(%arg0: i32) -> (i32, i32) {
    %c0_i32 = arith.constant 0 : i32
    %c0_i32_0 = arith.constant 0 : i32
    %c0_i32_1 = arith.constant 0 : i32
    return %c0_i32, %c0_i32_0 : i32, i32
  }
  func.func @transform_3(%arg0: i32) -> (i32, i32) {
    %c0_i32 = arith.constant 0 : i32
    %c0_i32_0 = arith.constant 0 : i32
    %c0_i32_1 = arith.constant 0 : i32
    return %c0_i32, %c0_i32_0 : i32, i32
  }
  func.func @transform_4(%arg0: i32) -> (i32, i32) {
    %c0_i32 = arith.constant 0 : i32
    %c0_i32_0 = arith.constant 0 : i32
    return %arg0, %c0_i32 : i32, i32
  }
}

</mosaic_0001>

<llo_original>
// kernel: tpu_custom_call.1
$region0: #{tpu_custom_call.1}
  #allocation0 [shape = 'u32[]', space=smem, size = 0x4, offset = 0x4, fixed_abs, tag = 'smem constant byte address 0x4 - core index']
  #allocation1 [shape = 'u32[72,128]{1,0:T(1,128)}', space=vmem, size = 0x9000, scoped, tag = 'internal scratch']
  %s0 = inlined_call_operand.hbm [shape: f32[24,32], index: 0, kind: input, shape index: {}]
  %s1 = inlined_call_operand.vmem [shape: f32[24,8], index: 1, kind: input, shape index: {}]
  %s2 = inlined_call_operand.vmem [shape: f32[32,128], index: 2, kind: input, shape index: {}]
  %s3 = inlined_call_operand.hbm [shape: f32[8,128], index: 3, kind: input, shape index: {}]
  %s4 = inlined_call_operand.hbm [shape: f32[24,128], index: 4, kind: output, shape index: {}]
  %s5 = sld [smem:[#allocation0]]
  $region57: #{tpu_custom_call.1} parent=0
    _
  %s7 = ssub.s32 1, %s5
  %s8 = scalar_select 0, %s7, %s5
  $region1: #{tpu_custom_call.1} parent=0
    #allocation2 [shape = 'u8[16384]{0}', space=vmem, size = 0x4000, scoped, tag = 'input window, operand 0']
    #allocation3 [shape = 's32[2]{0}', space=sflag, size = 0x8, scoped, tag = 'scoped memory for tpu_custom_call.1']
    #allocation4 [shape = 's32[2]{0}', space=sflag, size = 0x8, scoped, tag = 'scoped memory for tpu_custom_call.1']
    #allocation5 [shape = 'u8[4096]{0}', space=vmem, size = 0x1000, scoped, tag = 'input window, operand 3, single buffered']
    #allocation6 [shape = 's32[1]{0}', space=sflag, size = 0x4, scoped, tag = 'scoped memory for tpu_custom_call.1']
    #allocation7 [shape = 'u8[16384]{0}', space=vmem, size = 0x4000, scoped, tag = 'output window, operand 0']
    %9 = vsyncpa [#allocation3], 0
    %s10 = scalar_lea.sflag [#allocation3], 1
    %11 = vsyncpa %s10, 0
    %12 = vsyncpa [#allocation6], 0
    %13 = vsyncpa [#allocation4], 0
    %s14 = scalar_lea.sflag [#allocation4], 1
    %15 = vsyncpa %s14, 0
    loop: start=0, step=1, limit=4
    $region2: #{tpu_custom_call.1} parent=1 // loop_pre_header
      _
    $region3: #{tpu_custom_call.1} parent=1 // loop_header
      %s17 = sphi 0, %s21
      %p18 = scmp.ge.s32.totalorder %s17, 4
      %s27 = sphi 0, %s29
      %s30 = sphi 0, %s27
      %s31 = sphi 0, %s30
      %s47 = sphi 0, %s31
      %s53 = sphi 0, %s55
      %s56 = sphi 0, %s53
      %s57 = sphi 0, %s56
      %s73 = sphi 0, %s57
      %s77 = sphi 0, %s77
      %s79 = sphi 0, %s77
      %s80 = sphi 0, %s79
      %s94 = sphi 0, %s80
      %s98 = sphi 0, %s98
      %s100 = sphi 0, %s98
      %s101 = sphi 0, %s100
      %s115 = sphi 0, %s101
      %s121 = sphi 0, %s123
      %s124 = sphi 0, %s121
      %s125 = sphi 0, %s124
      %s141 = sphi 0, %s125
    $region4: #{tpu_custom_call.1} parent=1 // loop_header_branch
      %20 = sbr.rel (%p18) target = $region8
    $region5: #{tpu_custom_call.1} parent=1 // loop_body
      %s22 = ssub.s32 %s17, 1
      %s23 = ssub.s32 %s17, 2
      %s24 = sadd.s32 %s17, 1
      %s25 = ssub.s32 %s17, %s24
      %p26 = scmp.eq.s32.totalorder %s25, 0
      %s28 = sadd.s32 %s27, 1
      %s29 = scalar_select %p26, %s27, %s28
      %p32 = pneg %p26
      %p33 = scmp.eq.s32.totalorder %s17, 1
      %p34 = por %p32, %p33
      %p35 = scmp.ne.s32.totalorder %s27, %s30
      %p36 = scmp.eq.s32.totalorder %s17, 0
      %p37 = por %p35, %p36
      %p38 = scmp.ne.s32.totalorder %s27, %s30
      %p39 = scmp.eq.s32.totalorder %s22, 1
      %p40 = por %p38, %p39
      %p41 = scmp.ne.s32.totalorder %s30, %s31
      %p42 = scmp.eq.s32.totalorder %s22, 0
      %p43 = por %p41, %p42
      %p44 = scmp.ne.s32.totalorder %s30, %s31
      %p45 = scmp.eq.s32.totalorder %s23, 1
      %p46 = por %p44, %p45
      %p48 = scmp.ne.s32.totalorder %s31, %s47
      %p49 = scmp.eq.s32.totalorder %s23, 0
      %p50 = por %p48, %p49
      %s51 = ssub.s32 %s17, %s24
      %p52 = scmp.eq.s32.totalorder %s51, 0
      %s54 = sadd.s32 %s53, 1
      %s55 = scalar_select %p52, %s53, %s54
      %p58 = pneg %p52
      %p59 = scmp.eq.s32.totalorder %s17, 1
      %p60 = por %p58, %p59
      %p61 = scmp.ne.s32.totalorder %s53, %s56
      %p62 = scmp.eq.s32.totalorder %s17, 0
      %p63 = por %p61, %p62
      %p64 = scmp.ne.s32.totalorder %s53, %s56
      %p65 = scmp.eq.s32.totalorder %s22, 1
      %p66 = por %p64, %p65
      %p67 = scmp.ne.s32.totalorder %s56, %s57
      %p68 = scmp.eq.s32.totalorder %s22, 0
      %p69 = por %p67, %p68
      %p70 = scmp.ne.s32.totalorder %s56, %s57
      %p71 = scmp.eq.s32.totalorder %s23, 1
      %p72 = por %p70, %p71
      %p74 = scmp.ne.s32.totalorder %s57, %s73
      %p75 = scmp.eq.s32.totalorder %s23, 0
      %p76 = por %p74, %p75
      %s78 = sadd.s32 %s77, 1
      %p81 = scmp.eq.s32.totalorder %s17, 1
      %p82 = scmp.ne.s32.totalorder %s77, %s79
      %p83 = scmp.eq.s32.totalorder %s17, 0
      %p84 = por %p82, %p83
      %p85 = scmp.ne.s32.totalorder %s77, %s79
      %p86 = scmp.eq.s32.totalorder %s22, 1
      %p87 = por %p85, %p86
      %p88 = scmp.ne.s32.totalorder %s79, %s80
      %p89 = scmp.eq.s32.totalorder %s22, 0
      %p90 = por %p88, %p89
      %p91 = scmp.ne.s32.totalorder %s79, %s80
      %p92 = scmp.eq.s32.totalorder %s23, 1
      %p93 = por %p91, %p92
      %p95 = scmp.ne.s32.totalorder %s80, %s94
      %p96 = scmp.eq.s32.totalorder %s23, 0
      %p97 = por %p95, %p96
      %s99 = sadd.s32 %s98, 1
      %p102 = scmp.eq.s32.totalorder %s17, 1
      %p103 = scmp.ne.s32.totalorder %s98, %s100
      %p104 = scmp.eq.s32.totalorder %s17, 0
      %p105 = por %p103, %p104
      %p106 = scmp.ne.s32.totalorder %s98, %s100
      %p107 = scmp.eq.s32.totalorder %s22, 1
      %p108 = por %p106, %p107
      %p109 = scmp.ne.s32.totalorder %s100, %s101
      %p110 = scmp.eq.s32.totalorder %s22, 0
      %p111 = por %p109, %p110
      %p112 = scmp.ne.s32.totalorder %s100, %s101
      %p113 = scmp.eq.s32.totalorder %s23, 1
      %p114 = por %p112, %p113
      %p116 = scmp.ne.s32.totalorder %s101, %s115
      %p117 = scmp.eq.s32.totalorder %s23, 0
      %p118 = por %p116, %p117
      %s119 = ssub.s32 %s17, %s24
      %p120 = scmp.eq.s32.totalorder %s119, 0
      %s122 = sadd.s32 %s121, 1
      %s123 = scalar_select %p120, %s121, %s122
      %p126 = pneg %p120
      %p127 = scmp.eq.s32.totalorder %s17, 1
      %p128 = por %p126, %p127
      %p129 = scmp.ne.s32.totalorder %s121, %s124
      %p130 = scmp.eq.s32.totalorder %s17, 0
      %p131 = por %p129, %p130
      %p132 = scmp.ne.s32.totalorder %s121, %s124
      %p133 = scmp.eq.s32.totalorder %s22, 1
      %p134 = por %p132, %p133
      %p135 = scmp.ne.s32.totalorder %s124, %s125
      %p136 = scmp.eq.s32.totalorder %s22, 0
      %p137 = por %p135, %p136
      %p138 = scmp.ne.s32.totalorder %s124, %s125
      %p139 = scmp.eq.s32.totalorder %s23, 1
      %p140 = por %p138, %p139
      %p142 = scmp.ne.s32.totalorder %s125, %s141
      %p143 = scmp.eq.s32.totalorder %s23, 0
      %p144 = por %p142, %p143
      %p145 = scmp.le.s32.totalorder 1, %s17
      %p146 = scmp.lt.s32.totalorder %s17, 3
      %p147 = pnand %p145, %p146
      %p148 = pneg %p147
      // Predicated region
      $region9: #{tpu_custom_call.1} parent=5 // pred_check
        _
      $region10: #{tpu_custom_call.1} parent=5 // pred_check_branch
        %150 = sbr.rel (%p147) target = $region12
      $region11: #{tpu_custom_call.1} parent=5 // pred_region
        %s151 = ssub.s32 %s17, 1
        // Predicated region
        $region13: #{tpu_custom_call.1} parent=11 // pred_check
          %p152 = pneg %p90
        $region14: #{tpu_custom_call.1} parent=11 // pred_check_branch
          %154 = sbr.rel (%p152) target = $region16
        $region15: #{tpu_custom_call.1} parent=11 // pred_region
          _
        $region16: #{tpu_custom_call.1} parent=11 // pred_fallthru
          _
        // Predicated region
        $region17: #{tpu_custom_call.1} parent=11 // pred_check
          %p155 = pneg %p111
        $region18: #{tpu_custom_call.1} parent=11 // pred_check_branch
          %157 = sbr.rel (%p155) target = $region20
        $region19: #{tpu_custom_call.1} parent=11 // pred_region
          %159 = vsyncadd [#allocation6], 0
          %s161 = sshll.u32 %s3, 4
          %s162 = int_to_ptr.hbm [resolvable:$true] %s161
          %s163 = sshll.u32 [#allocation5], 4
          %s164 = int_to_ptr.vmem [resolvable:$true] %s163
          %166 = dma.hbm_to_vmem [thread:$0]  %s162, 128, %s164, [#allocation6]
        $region20: #{tpu_custom_call.1} parent=11 // pred_fallthru
          _
      $region12: #{tpu_custom_call.1} parent=5 // pred_fallthru
        _
      %p167 = scmp.lt.s32.totalorder %s17, 2
      // Predicated region
      $region21: #{tpu_custom_call.1} parent=5 // pred_check
        %p168 = pneg %p167
      $region22: #{tpu_custom_call.1} parent=5 // pred_check_branch
        %170 = sbr.rel (%p168) target = $region24
      $region23: #{tpu_custom_call.1} parent=5 // pred_region
        // Predicated region
        $region25: #{tpu_custom_call.1} parent=23 // pred_check
          %p171 = pneg %p37
        $region26: #{tpu_custom_call.1} parent=23 // pred_check_branch
          %173 = sbr.rel (%p171) target = $region28
        $region27: #{tpu_custom_call.1} parent=23 // pred_region
          %s174 = sand.u32 %s27, 1
          %s175 = scalar_lea.sflag [#allocation3], %s174
          %s176 = sand.u32 %s27, 1
          %s177 = smul.addr %s176, 16
          %s178 = scalar_lea.vmem [#allocation2], %s177
          %s179 = smul.u32 2, %s17
          %s180 = ssub.s32 3, %s179
          %p181 = scmp.lt.s32.totalorder %s180, 2
          %s182 = scalar_select %p181, %s180, 2
          %s183 = smul.u32 8, %s182
          %s184 = ssub.s32 16, %s183
          %s185 = sshll.u32 %s184, 4
          %186 = vsyncadd %s175, %s185
          %p187 = scmp.ne.s32.totalorder 0, %s183
          %s188 = smul.addr %s179, 8
          %s189 = scalar_lea.hbm %s0, %s188
          %s190 = smul.u32 8, %s182
          %s191 = sshll.u32 %s189, 4
          %s192 = int_to_ptr.hbm [resolvable:$true] %s191
          %s193 = sshll.u32 %s178, 4
          %s194 = int_to_ptr.vmem [resolvable:$true] %s193
          %s195 = sshll.u32 %s190, 4
          %199 = dma.hbm_to_vmem [thread:$0]  (%p187), %s192, %s195, %s194, %s175, 128, 128, 8
        $region28: #{tpu_custom_call.1} parent=23 // pred_fallthru
          _
        // Predicated region
        $region29: #{tpu_custom_call.1} parent=23 // pred_check
          %p200 = pneg %p63
        $region30: #{tpu_custom_call.1} parent=23 // pred_check_branch
          %202 = sbr.rel (%p200) target = $region32
        $region31: #{tpu_custom_call.1} parent=23 // pred_region
          %s203 = smul.u32 2, %s17
          %s204 = ssub.s32 3, %s203
          %p205 = scmp.lt.s32.totalorder %s204, 2
          %s206 = scalar_select %p205, %s204, 2
          %s207 = smul.u32 8, %s206
          %p208 = scmp.lt.s32.totalorder %s203, 2
          %s209 = scalar_select %p208, %s203, 2
          %s210 = smul.addr %s209, 8
          %s211 = scalar_lea.vmem %s1, %s210
          %s212 = smul.u32 2, %s17
          %s213 = ssub.s32 3, %s212
          %p214 = scmp.lt.s32.totalorder %s213, 2
          %s215 = scalar_select %p214, %s213, 2
          %s216 = smul.u32 8, %s215
        $region32: #{tpu_custom_call.1} parent=23 // pred_fallthru
          _
      $region24: #{tpu_custom_call.1} parent=5 // pred_fallthru
        _
      %p217 = scmp.le.s32.totalorder 1, %s17
      %p218 = scmp.lt.s32.totalorder %s17, 3
      %p219 = pnand %p217, %p218
      %p220 = pneg %p219
      // Predicated region
      $region33: #{tpu_custom_call.1} parent=5 // pred_check
        _
      $region34: #{tpu_custom_call.1} parent=5 // pred_check_branch
        %222 = sbr.rel (%p219) target = $region36
      $region35: #{tpu_custom_call.1} parent=5 // pred_region
        %s223 = ssub.s32 %s17, 1
        %s224 = sand.u32 %s30, 1
        %s225 = scalar_lea.sflag [#allocation3], %s224
        %s226 = sand.u32 %s30, 1
        %s227 = smul.addr %s226, 16
        %s228 = scalar_lea.vmem [#allocation2], %s227
        // Predicated region
        $region37: #{tpu_custom_call.1} parent=35 // pred_check
          %p229 = pneg %p43
        $region38: #{tpu_custom_call.1} parent=35 // pred_check_branch
          %231 = sbr.rel (%p229) target = $region40
        $region39: #{tpu_custom_call.1} parent=35 // pred_region
          %233 = dma.done %s225, 256
        $region40: #{tpu_custom_call.1} parent=35 // pred_fallthru
          _
        // Predicated region
        $region41: #{tpu_custom_call.1} parent=35 // pred_check
          %p234 = pneg %p111
        $region42: #{tpu_custom_call.1} parent=35 // pred_check_branch
          %236 = sbr.rel (%p234) target = $region44
        $region43: #{tpu_custom_call.1} parent=35 // pred_region
          %238 = dma.done [#allocation6], 128
        $region44: #{tpu_custom_call.1} parent=35 // pred_fallthru
          _
        %s239 = sand.u32 %s30, 1
        %s240 = scalar_lea.sflag [#allocation3], %s239
        %s241 = sand.u32 %s30, 1
        %s242 = smul.addr %s241, 16
        %s243 = scalar_lea.vmem [#allocation2], %s242
        %p244 = pneg %p43
        %p245 = pneg %p40
        %s246 = smul.u32 2, %s22
        %s247 = ssub.s32 3, %s246
        %p248 = scmp.lt.s32.totalorder %s247, 2
        %s249 = scalar_select %p248, %s247, 2
        %s250 = smul.u32 8, %s249
        %p251 = scmp.lt.s32.totalorder %s246, 2
        %s252 = scalar_select %p251, %s246, 2
        %s253 = smul.addr %s252, 8
        %s254 = scalar_lea.vmem %s1, %s253
        %p255 = pneg %p69
        %p256 = pneg %p66
        %p257 = pneg %p90
        %p258 = pneg %p87
        %p259 = pneg %p111
        %p260 = pneg %p108
        %p261 = pneg %p137
        %p262 = pneg %p134
        %s263 = sand.u32 %s124, 1
        %s264 = scalar_lea.sflag [#allocation4], %s263
        %s265 = sand.u32 %s124, 1
        %s266 = smul.addr %s265, 16
        %s267 = scalar_lea.vmem [#allocation7], %s266
        %s268 = smul.u32 2, %s22
        %s269 = ssub.s32 3, %s268
        %p270 = scmp.lt.s32.totalorder %s269, 2
        %s271 = scalar_select %p270, %s269, 2
        %s272 = smul.u32 8, %s271
        %s273 = smul.u32 2, %s22
        %s274 = ssub.s32 3, %s273
        %p275 = scmp.lt.s32.totalorder %s274, 2
        %s276 = scalar_select %p275, %s274, 2
        %s277 = smul.u32 8, %s276
        %p278 = scmp.lt.s32.totalorder %s273, 2
        %s279 = scalar_select %p278, %s273, 2
        %s280 = smul.addr %s279, 8
        %s281 = scalar_lea.vmem %s1, %s280
        %s282 = smul.u32 2, %s22
        %s283 = ssub.s32 3, %s282
        %p284 = scmp.lt.s32.totalorder %s283, 2
        %s285 = scalar_select %p284, %s283, 2
        %s286 = smul.u32 8, %s285
        %s287 = smul.u32 2, %s22
        %s288 = ssub.s32 3, %s287
        %p289 = scmp.lt.s32.totalorder %s288, 2
        %s290 = scalar_select %p289, %s288, 2
        %s291 = smul.u32 8, %s290
        %v292 = vld [vmem:[%s228] sm:$0xff]
        %v293 = vld [vmem:[%s228 + $0x8] sm:$0xff]
        %v294 = vld [vmem:[%s2] sm:$0xff]
        %v295 = vld [vmem:[%s2 + $0x8] sm:$0xff]
        %v296 = vld [vmem:[%s2 + $0x10] sm:$0xff]
        %v297 = vld [vmem:[%s2 + $0x18] sm:$0xff]
        %v298 = vld [vmem:[%s281] sm:$0xff]
        %v299 = vld [vmem:[%s281 + $0x8] sm:$0xff]
        %v300 = vld [vmem:[#allocation5] sm:$0xff]
        %vm301 = vcmask 64512
        %v303 = vsel %vm301, %v298, 0
        %v306 = vsel %vm301, %v299, 0
        %308 = vmatpush.msra.mxu0 0.0
        %309 = vmatpush.msra.mxu0 0.0
        %310 = vmatpush.msra.mxu0 0.0
        %311 = vmatpush.msra.mxu0 0.0
        %312 = vmatpush.msra.mxu0 0.0
        %313 = vmatpush.msra.mxu0 0.0
        %314 = vmatpush.msra.mxu0 0.0
        %315 = vmatpush.msra.mxu0 0.0
        %316 = vmatpush.msra.mxu0 0.0
        %317 = vmatpush.msra.mxu0 0.0
        %318 = vmatpush.msra.mxu0 0.0
        %319 = vmatpush.msra.mxu0 0.0
        %320 = vmatpush.msra.mxu0 0.0
        %321 = vmatpush.msra.mxu0 0.0
        %322 = vmatpush.msra.mxu0 0.0
        %323 = vmatpush.msra.mxu0 %v300
        %324 = vmatmul.f32.gmra.mxu0 %v303
        %v325 = vpop.f32.mrf.mxu0
        %v326 = vadd.f32 0.0, %v325
        %327 = vmatmul.f32.gmra.mxu0 %v306
        %v328 = vpop.f32.mrf.mxu0
        %v329 = vadd.f32 0.0, %v328
        %330 = vdwg.mxu0
        %vm331 = vcmask 261120
        %v333 = vsel %vm331, %v292, 0
        %v336 = vsel %vm331, %v293, 0
        %338 = vmatpush.msra.mxu0 0.0
        %339 = vmatpush.msra.mxu0 0.0
        %340 = vmatpush.msra.mxu0 0.0
        %341 = vmatpush.msra.mxu0 0.0
        %342 = vmatpush.msra.mxu0 0.0
        %343 = vmatpush.msra.mxu0 0.0
        %344 = vmatpush.msra.mxu0 0.0
        %345 = vmatpush.msra.mxu0 0.0
        %346 = vmatpush.msra.mxu0 0.0
        %347 = vmatpush.msra.mxu0 0.0
        %348 = vmatpush.msra.mxu0 0.0
        %349 = vmatpush.msra.mxu0 0.0
        %350 = vmatpush.msra.mxu0 %v297
        %351 = vmatpush.msra.mxu0 %v296
        %352 = vmatpush.msra.mxu0 %v295
        %353 = vmatpush.msra.mxu0 %v294
        %354 = vmatmul.f32.gmra.mxu0 %v333
        %v355 = vpop.f32.mrf.mxu0
        %v356 = vadd.f32 %v326, %v355
        %357 = vmatmul.f32.gmra.mxu0 %v336
        %v358 = vpop.f32.mrf.mxu0
        %v359 = vadd.f32 %v329, %v358
        %360 = vdwg.mxu0
        %361 = vst [vmem:[%s267] sm:$0xff] %v356
        %362 = vst [vmem:[%s267 + $0x8] sm:$0xff] %v359
        %s363 = sand.u32 %s124, 1
        %s364 = scalar_lea.sflag [#allocation4], %s363
        %s365 = sand.u32 %s124, 1
        %s366 = smul.addr %s365, 16
        %s367 = scalar_lea.vmem [#allocation7], %s366
        // Predicated region
        $region45: #{tpu_custom_call.1} parent=35 // pred_check
          %p368 = pneg %p134
        $region46: #{tpu_custom_call.1} parent=35 // pred_check_branch
          %370 = sbr.rel (%p368) target = $region48
        $region47: #{tpu_custom_call.1} parent=35 // pred_region
          %s371 = smul.u32 2, %s22
          %s372 = ssub.s32 3, %s371
          %p373 = scmp.lt.s32.totalorder %s372, 2
          %s374 = scalar_select %p373, %s372, 2
          %s375 = smul.u32 8, %s374
          %s376 = ssub.s32 16, %s375
          %s377 = sshll.u32 %s376, 4
          %378 = vsyncadd %s364, %s377
          %p379 = scmp.ne.s32.totalorder 0, %s375
          %s380 = smul.addr %s371, 8
          %s381 = scalar_lea.hbm %s4, %s380
          %s382 = smul.u32 8, %s374
          %s383 = sshll.u32 %s367, 4
          %s384 = int_to_ptr.vmem [resolvable:$true] %s383
          %s385 = sshll.u32 %s381, 4
          %s386 = int_to_ptr.hbm [resolvable:$true] %s385
          %s387 = sshll.u32 %s382, 4
          %391 = dma.vmem_to_hbm [thread:$0]  (%p379), %s384, %s387, %s386, %s364, 128, 128, 8
        $region48: #{tpu_custom_call.1} parent=35 // pred_fallthru
          _
      $region36: #{tpu_custom_call.1} parent=5 // pred_fallthru
        _
      %p392 = scmp.le.s32.totalorder 2, %s17
      // Predicated region
      $region49: #{tpu_custom_call.1} parent=5 // pred_check
        %p393 = pneg %p392
      $region50: #{tpu_custom_call.1} parent=5 // pred_check_branch
        %395 = sbr.rel (%p393) target = $region52
      $region51: #{tpu_custom_call.1} parent=5 // pred_region
        %s396 = ssub.s32 %s17, 2
        // Predicated region
        $region53: #{tpu_custom_call.1} parent=51 // pred_check
          %p397 = pneg %p140
        $region54: #{tpu_custom_call.1} parent=51 // pred_check_branch
          %399 = sbr.rel (%p397) target = $region56
        $region55: #{tpu_custom_call.1} parent=51 // pred_region
          %s400 = sand.u32 %s125, 1
          %s401 = scalar_lea.sflag [#allocation4], %s400
          %s402 = sand.u32 %s125, 1
          %s403 = smul.addr %s402, 16
          %s404 = scalar_lea.vmem [#allocation7], %s403
          %406 = dma.done %s401, 256
        $region56: #{tpu_custom_call.1} parent=51 // pred_fallthru
          _
      $region52: #{tpu_custom_call.1} parent=5 // pred_fallthru
        _
    $region6: #{tpu_custom_call.1} parent=1 // loop_footer
      %s21 = sadd.s32 1, %s17
    $region7: #{tpu_custom_call.1} parent=1 // loop_footer_branch
      %16 = sbr.rel target = $region3
    $region8: #{tpu_custom_call.1} parent=1 // loop_exit
      _
    %407 = vsyncpa [#allocation3], 1
    %s408 = scalar_lea.sflag [#allocation3], 1
    %409 = vsyncpa %s408, 1
    %410 = vsyncpa [#allocation6], 1
    %411 = vsyncpa [#allocation4], 1
    %s412 = scalar_lea.sflag [#allocation4], 1
    %413 = vsyncpa %s412, 1

</llo_original>
